<compile_context>
chip_gen: v5e
topology: v5e:2x2
jax: 0.10.0
libtpu: 0.0.40
codegen_flags: <defaults>
</compile_context>

<pallas_src>
import functools

import jax
import jax.numpy as jnp
from jax.experimental import pallas as pl
from jax.experimental.pallas import tpu as pltpu


def _round_up(x, m):
    return -(-x // m) * m


def focal_loss_kernel(*refs, gamma, use_alpha, alpha_is_per_class,
                      compute_dtype, j_inner, hw_valid, needs_mask):
    if use_alpha:
        logits_ref, target_ref, alpha_ref, out_ref = refs
    else:
        logits_ref, target_ref, out_ref = refs
        alpha_ref = None

    jo = pl.program_id(1)
    j = pl.program_id(2)

    x = logits_ref[0].astype(compute_dtype)        # (C, thw)  classes x samples
    t = target_ref[0].astype(jnp.int32)            # (1, thw)
    num_classes, thw = x.shape

    # log-softmax over the class (sublane) axis; the full (C, thw) log-prob
    # tensor is never materialized: logpt = z[target] - lse.
    # Hot (C, thw) ops run in compute_dtype (bf16 on v6e/v7x for bf16 inputs);
    # the exp-sum, log and everything downstream stay in f32 for accuracy.
    m = jnp.max(x, axis=0, keepdims=True)          # (1, thw)
    z = x - m
    sum_ez = jnp.sum(jnp.exp(z).astype(jnp.float32), axis=0, keepdims=True)
    lse = jnp.log(sum_ez)                          # (1, thw) f32

    row_c = jax.lax.broadcasted_iota(jnp.int32, (num_classes, thw), 0)
    onehot_c = row_c == t                                       # (C, thw)
    # At most one selected value per lane -> exact even in bf16; upcast after.
    zt = jnp.sum(jnp.where(onehot_c, z, 0.0), axis=0,
                 keepdims=True).astype(jnp.float32)             # (1, thw)
    logpt = zt - lse
    pt = jnp.exp(logpt)

    # NOTE: out-of-range targets (e.g. ignore_index=255) and len(alpha) < C
    # silently contribute (zt=0 / at=0) instead of erroring like torch.gather.
    if use_alpha:
        alpha = alpha_ref[...].astype(jnp.float32)              # (A, 1)
        if alpha_is_per_class:
            onehot_a = onehot_c                                 # reuse mask (A == C)
        else:
            a_len = alpha.shape[0]
            row_a = jax.lax.broadcasted_iota(jnp.int32, (a_len, thw), 0)
            onehot_a = row_a == t
        at = jnp.sum(jnp.where(onehot_a, alpha, 0.0), axis=0, keepdims=True)
        logpt_w = logpt * at
    else:
        logpt_w = logpt

    # focal factor, specialized at trace time (integer gamma -> VPU multiplies,
    # gamma == 0 -> elided entirely; only fractional gammas hit the pow path).
    g = float(gamma)
    if g == 0.0:
        loss = -logpt_w
    else:
        one_minus_pt = jnp.maximum(1.0 - pt, 0.0)
        if g == float(int(g)) and 1 <= int(g) <= 4:
            focal = one_minus_pt
            for _ in range(int(g) - 1):
                focal = focal * one_minus_pt
        else:
            focal = jnp.power(one_minus_pt, g)
        loss = -(focal * logpt_w)

    # Zero the contribution of padded tail lanes (HW padded up to a tile
    # multiple in the wrapper).  Per-lane compute, so garbage pads never
    # contaminate valid lanes.
    if needs_mask:
        lane = jax.lax.broadcasted_iota(jnp.int32, (1, thw), 1)
        start = (jo * j_inner + j) * thw
        loss = jnp.where(start + lane < hw_valid, loss, 0.0)

    # Lane-dense accumulation: resident output block across the arbitrary axis.
    # Init folded into the first step (no separate zero store + add).
    @pl.when(j == 0)
    def _():
        out_ref[...] = loss[None, None]

    @pl.when(j > 0)
    def _():
        out_ref[...] += loss[None, None]


def _choose_thw(hw, c, logits_itemsize, target_itemsize, compute_itemsize,
                budget_bytes=24 << 20, max_lanes=16384):
    """Largest lane-aligned (multiple of 128) sample tile whose sublane-padded,
    double-buffered VMEM footprint (plus an allowance for live in-kernel
    temporaries) stays under `budget_bytes`."""
    sub = {4: 8, 2: 16, 1: 32}                      # sublanes per physical tile
    c_pad_in = _round_up(c, sub[logits_itemsize])   # padded logits tile rows
    c_pad_cmp = _round_up(c, sub[compute_itemsize])  # padded compute-temp rows
    tgt_row = sub[target_itemsize] * target_itemsize  # (1, thw) row: 32 B/lane
    acc_row = 8 * 4                                   # (1, thw) f32 row
    # bytes per lane (= per sample column):
    #   2x double-buffered logits tile + target row + accumulator row
    #   + ~3 simultaneously-live (C, thw) compute temporaries.
    per_lane = (2 * (c_pad_in * logits_itemsize + tgt_row + acc_row)
                + 3 * c_pad_cmp * compute_itemsize)
    max_thw = max(128, (budget_bytes // per_lane) // 128 * 128)
    max_thw = min(max_thw, max_lanes)
    return int(min(max_thw, _round_up(hw, 128)))


def _bf16_compute_supported():
    """bf16 VPU/EUP exist on v6e and later; keep v5e (and older) in f32."""
    try:
        kind = jax.devices()[0].device_kind.lower()
    except Exception:
        return False
    return not any(v in kind for v in ("v2", "v3", "v4", "v5"))


def focal_loss(x_nchw, target_nhw, gamma=0.0, alpha=None, size_average=True,
               thw=None, compute_dtype=None, budget_bytes=24 << 20,
               vmem_limit_bytes=48 << 20, logits_buffering=None):
    """Pallas FocalLoss forward. x_nchw: (N, C, H, W), target_nhw: (N, H, W) int."""
    N, C, H, W = x_nchw.shape
    HW = H * W

    if compute_dtype is None:
        if x_nchw.dtype == jnp.bfloat16 and _bf16_compute_supported():
            compute_dtype = jnp.bfloat16
        else:
            compute_dtype = jnp.float32
    compute_dtype = jnp.dtype(compute_dtype)

    # Free reshapes only -- no transpose; logits are DMA'd in their native dtype.
    logits = x_nchw.reshape(N, C, HW)
    # Halve target HBM traffic (int16 covers any realistic class count).
    # TODO(synk): drop to int8 when C < 128 once int8 (1, thw) loads are vetted.
    target_dtype = jnp.int16 if C <= 32767 else jnp.int32
    target = target_nhw.reshape(N, 1, HW).astype(target_dtype)

    if alpha is None:
        use_alpha = False
        alpha_is_per_class = False
        alpha_arr = None
    else:
        use_alpha = True
        if isinstance(alpha, (float, int)):
            # Matches the torch ctor: Tensor([alpha, 1-alpha]) -- only
            # meaningful for 2-class targets (targets >= 2 are out of range).
            alpha_arr = jnp.array([float(alpha), 1.0 - float(alpha)], jnp.float32)
        else:
            alpha_arr = jnp.asarray(alpha, jnp.float32).reshape(-1)
        alpha_is_per_class = alpha_arr.shape[0] == C
        alpha_arr = alpha_arr.reshape(-1, 1)        # (A, 1): classes on sublanes

    logits_itemsize = jnp.dtype(logits.dtype).itemsize
    if thw is None:
        thw = _choose_thw(HW, C, logits_itemsize,
                          jnp.dtype(target_dtype).itemsize,
                          compute_dtype.itemsize, budget_bytes)
    assert thw % 128 == 0, "sample tile must be lane-aligned (multiple of 128)"

    n_tiles = -(-HW // thw)
    # Megacore balance (v7x has 2 TCs/chip): when the batch axis alone can't be
    # split evenly across cores, add a second "parallel" split over the sample
    # axis.  Near-zero cost on single-TC v5e/v6e (one extra grid dim + thw*4
    # extra output bytes per batch).
    if N % 2 == 1 and n_tiles >= 2:
        if n_tiles % 2 == 1:
            n_tiles += 1
        j_outer = 2
    else:
        j_outer = 1
    j_inner = n_tiles // j_outer

    HW_pad = n_tiles * thw
    needs_mask = HW_pad != HW
    if needs_mask:
        pad = HW_pad - HW
        logits = jnp.pad(logits, ((0, 0), (0, 0), (0, pad)))
        target = jnp.pad(target, ((0, 0), (0, 0), (0, pad)))

    kernel = functools.partial(
        focal_loss_kernel,
        gamma=float(gamma),
        use_alpha=use_alpha,
        alpha_is_per_class=alpha_is_per_class,
        compute_dtype=compute_dtype,
        j_inner=j_inner,
        hw_valid=HW,
        needs_mask=needs_mask,
    )

    logits_spec_kwargs = {}
    if logits_buffering is not None:
        # Optional deeper pipelining if profiles show exposed DMA at small thw.
        logits_spec_kwargs["pipeline_mode"] = pl.Buffered(int(logits_buffering))

    in_specs = [
        pl.BlockSpec((1, C, thw), lambda n, jo, j: (n, 0, jo * j_inner + j),
                     **logits_spec_kwargs),
        pl.BlockSpec((1, 1, thw), lambda n, jo, j: (n, 0, jo * j_inner + j)),
    ]
    args = [logits, target]
    if use_alpha:
        in_specs.append(pl.BlockSpec((alpha_arr.shape[0], 1),
                                     lambda n, jo, j: (0, 0)))
        args.append(alpha_arr)

    partial_sums = pl.pallas_call(
        kernel,
        out_shape=jax.ShapeDtypeStruct((N, j_outer, 1, thw), jnp.float32),
        grid_spec=pltpu.PrefetchScalarGridSpec(
            num_scalar_prefetch=0,
            grid=(N, j_outer, j_inner),
            in_specs=in_specs,
            # Resident per-(batch, chunk) accumulator across the reduction axis.
            out_specs=pl.BlockSpec((1, 1, 1, thw),
                                   lambda n, jo, j: (n, jo, 0, 0)),
        ),
        compiler_params=pltpu.CompilerParams(
            dimension_semantics=("parallel", "parallel", "arbitrary"),
            vmem_limit_bytes=vmem_limit_bytes),
    )(*args)

    total = jnp.sum(partial_sums)                 # tiny reduce in XLA
    if size_average:
        total = total / (N * HW)
    return total


def focal_loss_ref(x_nchw, target_nhw, gamma, alpha_vec, size_average):
    """Pure-JAX reference mirroring the PyTorch forward."""
    N, C, H, W = x_nchw.shape
    logits = jnp.transpose(x_nchw, (0, 2, 3, 1)).reshape(-1, C).astype(jnp.float32)
    target = target_nhw.reshape(-1).astype(jnp.int32)
    logp = jax.nn.log_softmax(logits, axis=-1)
    logpt = jnp.take_along_axis(logp, target[:, None], axis=1)[:, 0]
    pt = jnp.exp(logpt)
    if alpha_vec is not None:
        logpt = logpt * alpha_vec[target]
    loss = -1.0 * (1.0 - pt) ** gamma * logpt
    return jnp.mean(loss) if size_average else jnp.sum(loss)


if __name__ == "__main__":
    key = jax.random.PRNGKey(0)
    kx, kt, kx3, kt3 = jax.random.split(key, 4)

    N, C, H, W = 2, 4, 16, 16
    x = jax.random.normal(kx, (N, C, H, W), dtype=jnp.float32)
    target = jax.random.randint(kt, (N, H, W), 0, C, dtype=jnp.int32)

    # Config 1: per-class alpha list, gamma=2, mean reduction.
    gamma, alpha, size_average = 2.0, [0.25, 0.25, 0.25, 0.25], True
    out = jax.block_until_ready(
        focal_loss(x, target, gamma=gamma, alpha=alpha, size_average=size_average))
    ref = jax.block_until_ready(
        focal_loss_ref(x, target, gamma, jnp.asarray(alpha, jnp.float32), size_average))
    assert jnp.allclose(out, ref, rtol=2e-5, atol=1e-5), (out, ref)

    # Config 2: no alpha, gamma=0 (plain NLL), sum reduction -- elided paths.
    out2 = jax.block_until_ready(
        focal_loss(x, target, gamma=0.0, alpha=None, size_average=False))
    ref2 = jax.block_until_ready(
        focal_loss_ref(x, target, 0.0, None, False))
    assert jnp.allclose(out2, ref2, rtol=2e-5, atol=1e-4), (out2, ref2)

    # Config 3: odd batch, non-128-aligned HW, small forced tile -- exercises
    # the pad+mask path and the megacore HW split (j_outer=2).
    N3, H3, W3 = 3, 11, 13
    x3 = jax.random.normal(kx3, (N3, C, H3, W3), dtype=jnp.float32)
    t3 = jax.random.randint(kt3, (N3, H3, W3), 0, C, dtype=jnp.int32)
    alpha3 = [0.1, 0.2, 0.3, 0.4]
    out3 = jax.block_until_ready(
        focal_loss(x3, t3, gamma=3.0, alpha=alpha3, size_average=False, thw=128))
    ref3 = jax.block_until_ready(
        focal_loss_ref(x3, t3, 3.0, jnp.asarray(alpha3, jnp.float32), False))
    assert jnp.allclose(out3, ref3, rtol=2e-5, atol=1e-3), (out3, ref3)

    # Config 4: bf16 logits -- packed-bf16 hot loop on v6e/v7x (f32 on v5e).
    xb = x.astype(jnp.bfloat16)
    out4 = jax.block_until_ready(
        focal_loss(xb, target, gamma=2.0, alpha=None, size_average=True))
    ref4 = jax.block_until_ready(
        focal_loss_ref(xb, target, 2.0, None, True))
    assert jnp.allclose(out4, ref4, rtol=3e-2, atol=3e-3), (out4, ref4)

    print("KERNEL_OK")
</pallas_src>

<mosaic_0001>
module attributes {stable_mosaic.version = 11 : i64} {
  func.func @focal_loss_kernel(%arg0: i32, %arg1: i32, %arg2: i32, %arg3: memref<1x4x256xf32, #tpu.memory_space<vmem>>, %arg4: memref<1x1x256xi16, #tpu.memory_space<vmem>>, %arg5: memref<4x1xf32, #tpu.memory_space<vmem>>, %arg6: memref<1x1x1x256xf32, #tpu.memory_space<vmem>>) attributes {dimension_semantics = [#tpu.dimension_semantics<parallel>, #tpu.dimension_semantics<parallel>, #tpu.dimension_semantics<arbitrary>], iteration_bounds = array<i64: 2, 1, 1>, scalar_prefetch = 0 : i64, scratch_operands = 0 : i64, tpu.core_type = #tpu.core_type<tc>, window_params = [{transform_indices = @transform_0, window_bounds = array<i64: 1, 4, 256>}, {transform_indices = @transform_1, window_bounds = array<i64: 1, 1, 256>}, {pipeline_mode = #tpu.pipeline_mode<synchronous>, transform_indices = @transform_2, window_bounds = array<i64: 4, 1>}, {transform_indices = @transform_3, window_bounds = array<i64: 1, 1, 1, 256>}]} {
    %c0 = arith.constant 0 : index
    %c0_0 = arith.constant 0 : index
    %c0_1 = arith.constant 0 : index
    %0 = vector.load %arg3[%c0, %c0_0, %c0_1] : memref<1x4x256xf32, #tpu.memory_space<vmem>>, vector<1x4x256xf32>
    %1 = vector.shape_cast %0 : vector<1x4x256xf32> to vector<4x256xf32>
    %c0_2 = arith.constant 0 : index
    %c0_3 = arith.constant 0 : index
    %c0_4 = arith.constant 0 : index
    %2 = vector.load %arg4[%c0_2, %c0_3, %c0_4] : memref<1x1x256xi16, #tpu.memory_space<vmem>>, vector<1x1x256xi16>
    %3 = vector.shape_cast %2 : vector<1x1x256xi16> to vector<1x256xi16>
    %4 = arith.extsi %3 : vector<1x256xi16> to vector<1x256xi32>
    %cst = arith.constant dense<0xFF800000> : vector<256xf32>
    %5 = vector.multi_reduction <maximumf>, %1, %cst [0] : vector<4x256xf32> to vector<256xf32>
    %6 = vector.shape_cast %5 : vector<256xf32> to vector<1x256xf32>
    %7 = vector.broadcast %6 : vector<1x256xf32> to vector<4x256xf32>
    %8 = arith.subf %1, %7 : vector<4x256xf32>
    %9 = math.exp %8 : vector<4x256xf32>
    %cst_5 = arith.constant dense<0.000000e+00> : vector<256xf32>
    %10 = vector.multi_reduction <add>, %9, %cst_5 [0] : vector<4x256xf32> to vector<256xf32>
    %11 = vector.shape_cast %10 : vector<256xf32> to vector<1x256xf32>
    %12 = math.log %11 : vector<1x256xf32>
    %13 = tpu.iota {dimensions = array<i32: 0>} : vector<4x256xi32>
    %14 = vector.broadcast %4 : vector<1x256xi32> to vector<4x256xi32>
    %15 = arith.cmpi eq, %13, %14 : vector<4x256xi32>
    %cst_6 = arith.constant 0.000000e+00 : f32
    %16 = vector.broadcast %cst_6 : f32 to vector<4x256xf32>
    %17 = arith.select %15, %8, %16 : vector<4x256xi1>, vector<4x256xf32>
    %cst_7 = arith.constant dense<0.000000e+00> : vector<256xf32>
    %18 = vector.multi_reduction <add>, %17, %cst_7 [0] : vector<4x256xf32> to vector<256xf32>
    %19 = vector.shape_cast %18 : vector<256xf32> to vector<1x256xf32>
    %20 = arith.subf %19, %12 : vector<1x256xf32>
    %21 = math.exp %20 : vector<1x256xf32>
    %c0_8 = arith.constant 0 : index
    %c0_9 = arith.constant 0 : index
    %22 = vector.load %arg5[%c0_8, %c0_9] : memref<4x1xf32, #tpu.memory_space<vmem>>, vector<4x1xf32>
    %cst_10 = arith.constant 0.000000e+00 : f32
    %23 = vector.shape_cast %22 : vector<4x1xf32> to vector<4x1xf32>
    %24 = vector.broadcast %23 : vector<4x1xf32> to vector<4x256xf32>
    %25 = vector.broadcast %cst_10 : f32 to vector<4x256xf32>
    %26 = arith.select %15, %24, %25 : vector<4x256xi1>, vector<4x256xf32>
    %cst_11 = arith.constant dense<0.000000e+00> : vector<256xf32>
    %27 = vector.multi_reduction <add>, %26, %cst_11 [0] : vector<4x256xf32> to vector<256xf32>
    %28 = vector.shape_cast %27 : vector<256xf32> to vector<1x256xf32>
    %29 = arith.mulf %20, %28 : vector<1x256xf32>
    %cst_12 = arith.constant 1.000000e+00 : f32
    %30 = vector.broadcast %cst_12 : f32 to vector<1x256xf32>
    %31 = arith.subf %30, %21 : vector<1x256xf32>
    %cst_13 = arith.constant 0.000000e+00 : f32
    %32 = vector.broadcast %cst_13 : f32 to vector<1x256xf32>
    %33 = arith.maximumf %31, %32 : vector<1x256xf32>
    %34 = arith.mulf %33, %33 : vector<1x256xf32>
    %35 = arith.mulf %34, %29 : vector<1x256xf32>
    %cst_14 = arith.constant 0.000000e+00 : f32
    %36 = vector.broadcast %cst_14 : f32 to vector<1x256xf32>
    %37 = arith.subf %36, %35 : vector<1x256xf32>
    %c0_i32 = arith.constant 0 : i32
    %38 = arith.cmpi eq, %arg2, %c0_i32 : i32
    %39 = arith.extui %38 : i1 to i32
    %c0_i32_15 = arith.constant 0 : i32
    %40 = arith.cmpi ne, %39, %c0_i32_15 : i32
    scf.if %40 {
      %44 = vector.shape_cast %37 : vector<1x256xf32> to vector<1x1x1x256xf32>
      %c0_18 = arith.constant 0 : index
      %c0_19 = arith.constant 0 : index
      %c0_20 = arith.constant 0 : index
      %c0_21 = arith.constant 0 : index
      %45 = vector.load %arg6[%c0_18, %c0_19, %c0_20, %c0_21] : memref<1x1x1x256xf32, #tpu.memory_space<vmem>>, vector<1x1x1x256xf32>
      tpu.vector_store %arg6[%c0_18, %c0_19, %c0_20, %c0_21], %44 {strides = array<i32>} : memref<1x1x1x256xf32, #tpu.memory_space<vmem>>, vector<1x1x1x256xf32>,
    } else {
    }
    %c0_i32_16 = arith.constant 0 : i32
    %41 = arith.cmpi sgt, %arg2, %c0_i32_16 : i32
    %42 = arith.extui %41 : i1 to i32
    %c0_i32_17 = arith.constant 0 : i32
    %43 = arith.cmpi ne, %42, %c0_i32_17 : i32
    scf.if %43 {
      %c0_18 = arith.constant 0 : index
      %c0_19 = arith.constant 0 : index
      %c0_20 = arith.constant 0 : index
      %c0_21 = arith.constant 0 : index
      %44 = vector.load %arg6[%c0_18, %c0_19, %c0_20, %c0_21] : memref<1x1x1x256xf32, #tpu.memory_space<vmem>>, vector<1x1x1x256xf32>
      %45 = vector.shape_cast %37 : vector<1x256xf32> to vector<1x1x1x256xf32>
      %46 = arith.addf %44, %45 : vector<1x1x1x256xf32>
      %c0_22 = arith.constant 0 : index
      %c0_23 = arith.constant 0 : index
      %c0_24 = arith.constant 0 : index
      %c0_25 = arith.constant 0 : index
      %47 = vector.load %arg6[%c0_22, %c0_23, %c0_24, %c0_25] : memref<1x1x1x256xf32, #tpu.memory_space<vmem>>, vector<1x1x1x256xf32>
      tpu.vector_store %arg6[%c0_22, %c0_23, %c0_24, %c0_25], %46 {strides = array<i32>} : memref<1x1x1x256xf32, #tpu.memory_space<vmem>>, vector<1x1x1x256xf32>,
    } else {
    }
    return
  }
  func.func @transform_0(%arg0: i32, %arg1: i32, %arg2: i32) -> (i32, i32, i32) {
    %c1_i32 = arith.constant 1 : i32
    %0 = arith.muli %arg1, %c1_i32 : i32
    %1 = arith.addi %0, %arg2 : i32
    %c0_i32 = arith.constant 0 : i32
    %c0_i32_0 = arith.constant 0 : i32
    return %arg0, %c0_i32, %1 : i32, i32, i32
  }
  func.func @transform_1(%arg0: i32, %arg1: i32, %arg2: i32) -> (i32, i32, i32) {
    %c1_i32 = arith.constant 1 : i32
    %0 = arith.muli %arg1, %c1_i32 : i32
    %1 = arith.addi %0, %arg2 : i32
    %c0_i32 = arith.constant 0 : i32
    %c0_i32_0 = arith.constant 0 : i32
    return %arg0, %c0_i32, %1 : i32, i32, i32
  }
  func.func @transform_2(%arg0: i32, %arg1: i32, %arg2: i32) -> (i32, i32) {
    %c0_i32 = arith.constant 0 : i32
    %c0_i32_0 = arith.constant 0 : i32
    %c0_i32_1 = arith.constant 0 : i32
    return %c0_i32, %c0_i32_0 : i32, i32
  }
  func.func @transform_3(%arg0: i32, %arg1: i32, %arg2: i32) -> (i32, i32, i32, i32) {
    %c0_i32 = arith.constant 0 : i32
    %c0_i32_0 = arith.constant 0 : i32
    %c0_i32_1 = arith.constant 0 : i32
    return %arg0, %arg1, %c0_i32, %c0_i32_0 : i32, i32, i32, i32
  }
}

</mosaic_0001>

<llo_original>
// kernel: tpu_custom_call.1
$region0: #{tpu_custom_call.1}
  #allocation0 [shape = 'u32[]', space=smem, size = 0x4, offset = 0x4, fixed_abs, tag = 'smem constant byte address 0x4 - core index']
  #allocation1 [shape = 'u32[72,128]{1,0:T(1,128)}', space=vmem, size = 0x9000, scoped, tag = 'internal scratch']
  %s0 = inlined_call_operand.hbm [shape: f32[2,4,256], index: 0, kind: input, shape index: {}]
  %s1 = inlined_call_operand.vmem [shape: s16[2,1,256], index: 1, kind: input, shape index: {}]
  %s2 = inlined_call_operand.vmem [shape: f32[4,1], index: 2, kind: input, shape index: {}]
  %s3 = inlined_call_operand.hbm [shape: f32[2,1,1,256], index: 3, kind: output, shape index: {}]
  %s4 = sld [smem:[#allocation0]]
  $region57: #{tpu_custom_call.1} parent=0
    _
  %s6 = ssub.s32 1, %s4
  %s7 = scalar_select 0, %s6, %s4
  $region1: #{tpu_custom_call.1} parent=0
    #allocation2 [shape = 'u8[8192]{0}', space=vmem, size = 0x2000, scoped, tag = 'input window, operand 0']
    #allocation3 [shape = 's32[2]{0}', space=sflag, size = 0x8, scoped, tag = 'scoped memory for tpu_custom_call.1']
    #allocation4 [shape = 's32[2]{0}', space=sflag, size = 0x8, scoped, tag = 'scoped memory for tpu_custom_call.1']
    #allocation5 [shape = 'u8[2048]{0}', space=vmem, size = 0x800, scoped, tag = 'output window, operand 0']
    %8 = vsyncpa [#allocation3], 0
    %s9 = scalar_lea.sflag [#allocation3], 1
    %10 = vsyncpa %s9, 0
    %11 = vsyncpa [#allocation4], 0
    %s12 = scalar_lea.sflag [#allocation4], 1
    %13 = vsyncpa %s12, 0
    loop: start=0, step=1, limit=4
    $region2: #{tpu_custom_call.1} parent=1 // loop_pre_header
      _
    $region3: #{tpu_custom_call.1} parent=1 // loop_header
      %s15 = sphi 0, %s19
      %p16 = scmp.ge.s32.totalorder %s15, 4
      %s22 = sphi 0, %s41
      %s23 = sphi 0, %s37
      %s24 = sphi 0, %s33
      %s25 = sphi 0, %s22
      %s26 = sphi 0, %s23
      %s27 = sphi 0, %s24
      %s28 = sphi 0, %s25
      %s29 = sphi 0, %s26
      %s30 = sphi 0, %s27
      %s48 = sphi 0, %s50
      %s51 = sphi 0, %s48
      %s52 = sphi 0, %s51
      %s68 = sphi 0, %s52
      %s78 = sphi 0, %s80
      %s81 = sphi 0, %s78
      %s82 = sphi 0, %s81
      %s98 = sphi 0, %s82
      %s102 = sphi 0, %s102
      %s104 = sphi 0, %s102
      %s105 = sphi 0, %s104
      %s119 = sphi 0, %s105
      %s127 = sphi 0, %s129
      %s130 = sphi 0, %s127
      %s131 = sphi 0, %s130
      %s147 = sphi 0, %s131
    $region4: #{tpu_custom_call.1} parent=1 // loop_header_branch
      %18 = sbr.rel (%p16) target = $region8
    $region5: #{tpu_custom_call.1} parent=1 // loop_body
      %s20 = ssub.s32 %s15, 1
      %s21 = ssub.s32 %s15, 2
      %s31 = sadd.s32 1, %s24
      %p32 = scmp.ge.s32.totalorder %s31, 1
      %s33 = scalar_select %p32, 0, %s31
      %s34 = sadd.s32 1, %s23
      %s35 = scalar_select %p32, %s34, %s23
      %p36 = scmp.ge.s32.totalorder %s35, 1
      %s37 = scalar_select %p36, 0, %s35
      %s38 = sadd.s32 1, %s22
      %s39 = scalar_select %p36, %s38, %s22
      %p40 = scmp.ge.s32.totalorder %s39, 2
      %s41 = scalar_select %p40, 0, %s39
      %s42 = sadd.s32 %s23, %s24
      %s43 = sadd.s32 %s37, %s33
      %s44 = ssub.s32 %s22, %s41
      %s45 = ssub.s32 %s42, %s43
      %s46 = sor.u32 %s44, %s45
      %p47 = scmp.eq.s32.totalorder %s46, 0
      %s49 = sadd.s32 %s48, 1
      %s50 = scalar_select %p47, %s48, %s49
      %p53 = pneg %p47
      %p54 = scmp.eq.s32.totalorder %s15, 1
      %p55 = por %p53, %p54
      %p56 = scmp.ne.s32.totalorder %s48, %s51
      %p57 = scmp.eq.s32.totalorder %s15, 0
      %p58 = por %p56, %p57
      %p59 = scmp.ne.s32.totalorder %s48, %s51
      %p60 = scmp.eq.s32.totalorder %s20, 1
      %p61 = por %p59, %p60
      %p62 = scmp.ne.s32.totalorder %s51, %s52
      %p63 = scmp.eq.s32.totalorder %s20, 0
      %p64 = por %p62, %p63
      %p65 = scmp.ne.s32.totalorder %s51, %s52
      %p66 = scmp.eq.s32.totalorder %s21, 1
      %p67 = por %p65, %p66
      %p69 = scmp.ne.s32.totalorder %s52, %s68
      %p70 = scmp.eq.s32.totalorder %s21, 0
      %p71 = por %p69, %p70
      %s72 = sadd.s32 %s23, %s24
      %s73 = sadd.s32 %s37, %s33
      %s74 = ssub.s32 %s22, %s41
      %s75 = ssub.s32 %s72, %s73
      %s76 = sor.u32 %s74, %s75
      %p77 = scmp.eq.s32.totalorder %s76, 0
      %s79 = sadd.s32 %s78, 1
      %s80 = scalar_select %p77, %s78, %s79
      %p83 = pneg %p77
      %p84 = scmp.eq.s32.totalorder %s15, 1
      %p85 = por %p83, %p84
      %p86 = scmp.ne.s32.totalorder %s78, %s81
      %p87 = scmp.eq.s32.totalorder %s15, 0
      %p88 = por %p86, %p87
      %p89 = scmp.ne.s32.totalorder %s78, %s81
      %p90 = scmp.eq.s32.totalorder %s20, 1
      %p91 = por %p89, %p90
      %p92 = scmp.ne.s32.totalorder %s81, %s82
      %p93 = scmp.eq.s32.totalorder %s20, 0
      %p94 = por %p92, %p93
      %p95 = scmp.ne.s32.totalorder %s81, %s82
      %p96 = scmp.eq.s32.totalorder %s21, 1
      %p97 = por %p95, %p96
      %p99 = scmp.ne.s32.totalorder %s82, %s98
      %p100 = scmp.eq.s32.totalorder %s21, 0
      %p101 = por %p99, %p100
      %s103 = sadd.s32 %s102, 1
      %p106 = scmp.eq.s32.totalorder %s15, 1
      %p107 = scmp.ne.s32.totalorder %s102, %s104
      %p108 = scmp.eq.s32.totalorder %s15, 0
      %p109 = por %p107, %p108
      %p110 = scmp.ne.s32.totalorder %s102, %s104
      %p111 = scmp.eq.s32.totalorder %s20, 1
      %p112 = por %p110, %p111
      %p113 = scmp.ne.s32.totalorder %s104, %s105
      %p114 = scmp.eq.s32.totalorder %s20, 0
      %p115 = por %p113, %p114
      %p116 = scmp.ne.s32.totalorder %s104, %s105
      %p117 = scmp.eq.s32.totalorder %s21, 1
      %p118 = por %p116, %p117
      %p120 = scmp.ne.s32.totalorder %s105, %s119
      %p121 = scmp.eq.s32.totalorder %s21, 0
      %p122 = por %p120, %p121
      %s123 = ssub.s32 %s22, %s41
      %s124 = ssub.s32 %s23, %s37
      %s125 = sor.u32 %s123, %s124
      %p126 = scmp.eq.s32.totalorder %s125, 0
      %s128 = sadd.s32 %s127, 1
      %s129 = scalar_select %p126, %s127, %s128
      %p132 = pneg %p126
      %p133 = scmp.eq.s32.totalorder %s15, 1
      %p134 = por %p132, %p133
      %p135 = scmp.ne.s32.totalorder %s127, %s130
      %p136 = scmp.eq.s32.totalorder %s15, 0
      %p137 = por %p135, %p136
      %p138 = scmp.ne.s32.totalorder %s127, %s130
      %p139 = scmp.eq.s32.totalorder %s20, 1
      %p140 = por %p138, %p139
      %p141 = scmp.ne.s32.totalorder %s130, %s131
      %p142 = scmp.eq.s32.totalorder %s20, 0
      %p143 = por %p141, %p142
      %p144 = scmp.ne.s32.totalorder %s130, %s131
      %p145 = scmp.eq.s32.totalorder %s21, 1
      %p146 = por %p144, %p145
      %p148 = scmp.ne.s32.totalorder %s131, %s147
      %p149 = scmp.eq.s32.totalorder %s21, 0
      %p150 = por %p148, %p149
      %p151 = scmp.le.s32.totalorder 1, %s15
      %p152 = scmp.lt.s32.totalorder %s15, 3
      %p153 = pnand %p151, %p152
      %p154 = pneg %p153
      // Predicated region
      $region9: #{tpu_custom_call.1} parent=5 // pred_check
        _
      $region10: #{tpu_custom_call.1} parent=5 // pred_check_branch
        %156 = sbr.rel (%p153) target = $region12
      $region11: #{tpu_custom_call.1} parent=5 // pred_region
        %s157 = ssub.s32 %s15, 1
        // Predicated region
        $region13: #{tpu_custom_call.1} parent=11 // pred_check
          %p158 = pneg %p115
        $region14: #{tpu_custom_call.1} parent=11 // pred_check_branch
          %160 = sbr.rel (%p158) target = $region16
        $region15: #{tpu_custom_call.1} parent=11 // pred_region
          _
        $region16: #{tpu_custom_call.1} parent=11 // pred_fallthru
          _
      $region12: #{tpu_custom_call.1} parent=5 // pred_fallthru
        _
      %p161 = scmp.lt.s32.totalorder %s15, 2
      // Predicated region
      $region17: #{tpu_custom_call.1} parent=5 // pred_check
        %p162 = pneg %p161
      $region18: #{tpu_custom_call.1} parent=5 // pred_check_branch
        %164 = sbr.rel (%p162) target = $region20
      $region19: #{tpu_custom_call.1} parent=5 // pred_region
        // Predicated region
        $region21: #{tpu_custom_call.1} parent=19 // pred_check
          %p165 = pneg %p58
        $region22: #{tpu_custom_call.1} parent=19 // pred_check_branch
          %167 = sbr.rel (%p165) target = $region24
        $region23: #{tpu_custom_call.1} parent=19 // pred_region
          %s168 = sand.u32 %s48, 1
          %s169 = scalar_lea.sflag [#allocation3], %s168
          %s170 = sand.u32 %s48, 1
          %s171 = smul.addr %s170, 8
          %s172 = scalar_lea.vmem [#allocation2], %s171
          %s173 = sadd.s32 %s23, %s24
          %s174 = smul.u32 2, %s173
          %176 = vsyncadd %s169, 0
          %s177 = smul.addr %s22, 2
          %s178 = sadd.s32 %s174, %s177
          %s179 = smul.addr %s178, 4
          %s180 = scalar_lea.hbm %s0, %s179
          %s182 = sshll.u32 %s180, 4
          %s183 = int_to_ptr.hbm [resolvable:$true] %s182
          %s184 = sshll.u32 %s172, 4
          %s185 = int_to_ptr.vmem [resolvable:$true] %s184
          %187 = dma.hbm_to_vmem [thread:$0]  %s183, 128, %s185, %s169
        $region24: #{tpu_custom_call.1} parent=19 // pred_fallthru
          _
        // Predicated region
        $region25: #{tpu_custom_call.1} parent=19 // pred_check
          %p188 = pneg %p88
        $region26: #{tpu_custom_call.1} parent=19 // pred_check_branch
          %190 = sbr.rel (%p188) target = $region28
        $region27: #{tpu_custom_call.1} parent=19 // pred_region
          %s191 = sadd.s32 %s23, %s24
          %s192 = smul.u32 2, %s191
          %p193 = scmp.lt.s32.totalorder %s22, 1
          %s194 = scalar_select %p193, %s22, 1
          %p195 = scmp.lt.s32.totalorder %s192, 1
          %s196 = scalar_select %p195, %s192, 1
          %s197 = smul.addr %s194, 2
          %s198 = sadd.s32 %s196, %s197
          %s199 = scalar_lea.vmem %s1, %s198
          %s200 = sadd.s32 %s23, %s24
          %s201 = smul.u32 2, %s200
        $region28: #{tpu_custom_call.1} parent=19 // pred_fallthru
          _
      $region20: #{tpu_custom_call.1} parent=5 // pred_fallthru
        _
      %p202 = scmp.le.s32.totalorder 1, %s15
      %p203 = scmp.lt.s32.totalorder %s15, 3
      %p204 = pnand %p202, %p203
      %p205 = pneg %p204
      // Predicated region
      $region29: #{tpu_custom_call.1} parent=5 // pred_check
        _
      $region30: #{tpu_custom_call.1} parent=5 // pred_check_branch
        %207 = sbr.rel (%p204) target = $region32
      $region31: #{tpu_custom_call.1} parent=5 // pred_region
        %s208 = ssub.s32 %s15, 1
        %s209 = sand.u32 %s51, 1
        %s210 = scalar_lea.sflag [#allocation3], %s209
        %s211 = sand.u32 %s51, 1
        %s212 = smul.addr %s211, 8
        %s213 = scalar_lea.vmem [#allocation2], %s212
        // Predicated region
        $region33: #{tpu_custom_call.1} parent=31 // pred_check
          %p214 = pneg %p64
        $region34: #{tpu_custom_call.1} parent=31 // pred_check_branch
          %216 = sbr.rel (%p214) target = $region36
        $region35: #{tpu_custom_call.1} parent=31 // pred_region
          %218 = dma.done %s210, 128
        $region36: #{tpu_custom_call.1} parent=31 // pred_fallthru
          _
        %s219 = sand.u32 %s51, 1
        %s220 = scalar_lea.sflag [#allocation3], %s219
        %s221 = sand.u32 %s51, 1
        %s222 = smul.addr %s221, 8
        %s223 = scalar_lea.vmem [#allocation2], %s222
        %p224 = pneg %p64
        %p225 = pneg %p61
        %s226 = sadd.s32 %s26, %s27
        %s227 = smul.u32 2, %s226
        %p228 = scmp.lt.s32.totalorder %s25, 1
        %s229 = scalar_select %p228, %s25, 1
        %p230 = scmp.lt.s32.totalorder %s227, 1
        %s231 = scalar_select %p230, %s227, 1
        %s232 = smul.addr %s229, 2
        %s233 = sadd.s32 %s231, %s232
        %s234 = scalar_lea.vmem %s1, %s233
        %p235 = pneg %p94
        %p236 = pneg %p91
        %p237 = pneg %p115
        %p238 = pneg %p112
        %p239 = pneg %p143
        %p240 = pneg %p140
        %s241 = sand.u32 %s130, 1
        %s242 = scalar_lea.sflag [#allocation4], %s241
        %s243 = sand.u32 %s130, 1
        %s244 = smul.addr %s243, 2
        %s245 = scalar_lea.vmem [#allocation5], %s244
        %s246 = sadd.s32 %s26, %s27
        %s247 = smul.u32 2, %s246
        %s248 = sadd.s32 %s26, %s27
        %s249 = smul.u32 2, %s248
        %p250 = scmp.lt.s32.totalorder %s25, 1
        %s251 = scalar_select %p250, %s25, 1
        %p252 = scmp.lt.s32.totalorder %s249, 1
        %s253 = scalar_select %p252, %s249, 1
        %s254 = smul.addr %s251, 2
        %s255 = sadd.s32 %s253, %s254
        %s256 = scalar_lea.vmem %s1, %s255
        %s257 = sadd.s32 %s26, %s27
        %s258 = smul.u32 2, %s257
        %v259 = vld [vmem:[%s213] sm:$0xff]
        %v260 = vld [vmem:[%s256] sm:$0x3]
        %v261 = vunpack.c.l.b16 %v260
        %263 = vst [vmem:[#allocation1] ss:$2 sm:$0xff] %v259
        %v264 = vld.sshfl [vmem:[#allocation1] sm:$0xff pattern:$0x75316420]
        %v265 = vld.sshfl [vmem:[#allocation1 + $0x8] sm:$0xff pattern:$0x75316420]
        %vm268 = vcmask 1043456
        %v269 = vsel %vm268, %v264, -inf
        %v270 = vrot.slane %v269, 4
        %v271 = vmax.f32 %v269, %v270
        %v272 = vrot.slane %v271, 2
        %v273 = vmax.f32 %v271, %v272
        %v274 = vrot.slane %v273, 1
        %v275 = vmax.f32 %v273, %v274
        %v276 = vsel %vm268, %v265, -inf
        %v277 = vrot.slane %v276, 4
        %v278 = vmax.f32 %v276, %v277
        %v279 = vrot.slane %v278, 2
        %v280 = vmax.f32 %v278, %v279
        %v281 = vrot.slane %v280, 1
        %v282 = vmax.f32 %v280, %v281
        %v285 = vrot.slane %v282, 4
        %v286 = vsel %vm268, %v275, %v285
        %v288 = vsub.f32 %v259, %v286
        %v289 = vmul.f32 %v288, 1.442695
        %v290 = vpow.pop %v289
        %292 = vst [vmem:[#allocation1] ss:$2 sm:$0xff] %v290
        %v293 = vld.sshfl [vmem:[#allocation1] sm:$0xff pattern:$0x75316420]
        %v294 = vld.sshfl [vmem:[#allocation1 + $0x8] sm:$0xff pattern:$0x75316420]
        %v297 = vsel %vm268, %v293, 0.0
        %v298 = vrot.slane %v297, 4
        %v299 = vadd.f32 %v297, %v298
        %v300 = vrot.slane %v299, 2
        %v301 = vadd.f32 %v299, %v300
        %v302 = vrot.slane %v301, 1
        %v303 = vadd.f32 %v301, %v302
        %v304 = vsel %vm268, %v294, 0.0
        %v305 = vrot.slane %v304, 4
        %v306 = vadd.f32 %v304, %v305
        %v307 = vrot.slane %v306, 2
        %v308 = vadd.f32 %v306, %v307
        %v309 = vrot.slane %v308, 1
        %v310 = vadd.f32 %v308, %v309
        %v311 = vlog2.pop %v303
        %v312 = vmul.f32 %v311, 0.6931472
        %v313 = vlog2.pop %v310
        %v314 = vmul.f32 %v313, 0.6931472
        %v315 = vlaneseq
        %v316 = vshrl.u32 %v315, 7
        %v317 = vperm.slane %v261, 0
        %v318 = vperm.slane %v261, 2
        %v319 = vperm.slane %v317, 0
        %v320 = vperm.slane %v318, 0
        %vm321 = vcmp.eq.s32.totalorder %v316, %v319
        %vm322 = vcmp.eq.s32.totalorder %v316, %v320
        %324 = vst [vmem:[#allocation1] ss:$2 sm:$0xff] %v288
        %v325 = vld.sshfl [vmem:[#allocation1] sm:$0xff pattern:$0x75316420]
        %v326 = vld.sshfl [vmem:[#allocation1 + $0x8] sm:$0xff pattern:$0x75316420]
        %v329 = vsel %vm321, %v325, 0.0
        %v330 = vsel %vm322, %v326, 0.0
        %v331 = vsel %vm268, %v329, 0.0
        %v332 = vrot.slane %v331, 4
        %v333 = vadd.f32 %v331, %v332
        %v334 = vrot.slane %v333, 2
        %v335 = vadd.f32 %v333, %v334
        %v336 = vrot.slane %v335, 1
        %v337 = vadd.f32 %v335, %v336
        %v338 = vsel %vm268, %v330, 0.0
        %v339 = vrot.slane %v338, 4
        %v340 = vadd.f32 %v338, %v339
        %v341 = vrot.slane %v340, 2
        %v342 = vadd.f32 %v340, %v341
        %v343 = vrot.slane %v342, 1
        %v344 = vadd.f32 %v342, %v343
        %v345 = vsub.f32 %v337, %v312
        %v346 = vsub.f32 %v344, %v314
        %v347 = vmul.f32 %v345, 1.442695
        %v348 = vpow.pop %v347
        %v349 = vmul.f32 %v346, 1.442695
        %v350 = vpow.pop %v349
        %v351 = vld [vmem:[%s2] sm:$0xf]
        %353 = vset.pattern.permute.xlu0 0
        %354 = vperm.xlu0 %353, %v351
        %v355 = vpop.permute.xlu0 %354
        %v357 = vsel %vm321, %v355, 0.0
        %v358 = vsel %vm322, %v355, 0.0
        %v359 = vsel %vm268, %v357, 0.0
        %v360 = vrot.slane %v359, 4
        %v361 = vadd.f32 %v359, %v360
        %v362 = vrot.slane %v361, 2
        %v363 = vadd.f32 %v361, %v362
        %v364 = vrot.slane %v363, 1
        %v365 = vadd.f32 %v363, %v364
        %v366 = vsel %vm268, %v358, 0.0
        %v367 = vrot.slane %v366, 4
        %v368 = vadd.f32 %v366, %v367
        %v369 = vrot.slane %v368, 2
        %v370 = vadd.f32 %v368, %v369
        %v371 = vrot.slane %v370, 1
        %v372 = vadd.f32 %v370, %v371
        %v373 = vmul.f32 %v345, %v365
        %v374 = vmul.f32 %v346, %v372
        %v375 = vsub.f32 1.0, %v348
        %v376 = vsub.f32 1.0, %v350
        %v377 = vmax.f32 %v375, 0.0
        %v378 = vmax.f32 %v376, 0.0
        %v379 = vmul.f32 %v377, %v377
        %v380 = vmul.f32 %v378, %v378
        %v381 = vmul.f32 %v379, %v373
        %v382 = vmul.f32 %v380, %v374
        %v383 = vsub.f32 0.0, %v381
        %v384 = vsub.f32 0.0, %v382
        %p385 = scmp.eq.s32.totalorder %s27, 0
        // Predicated region
        $region37: #{tpu_custom_call.1} parent=31 // pred_check
          %p386 = pneg %p385
        $region38: #{tpu_custom_call.1} parent=31 // pred_check_branch
          %388 = sbr.rel (%p386) target = $region40
        $region39: #{tpu_custom_call.1} parent=31 // pred_region
          %v391 = vrot.slane %v384, 7
          %vm392 = vcmask 1040384
          %v393 = vsel %vm392, %v383, %v391
          %v395 = vlaneseq
          %vm396 = vcmp.ge.s32.totalorder %v395, 0
          %vm397 = vcmp.lt.s32.totalorder %v395, 256
          %vm398 = vmand %vm396, %vm397
          %399 = vst.msk [vmem:[%s245] sm:$0x3] %vm398, %v393
        $region40: #{tpu_custom_call.1} parent=31 // pred_fallthru
          _
        %p400 = scmp.gt.s32.totalorder %s27, 0
        // Predicated region
        $region41: #{tpu_custom_call.1} parent=31 // pred_check
          %p401 = pneg %p400
        $region42: #{tpu_custom_call.1} parent=31 // pred_check_branch
          %403 = sbr.rel (%p401) target = $region44
        $region43: #{tpu_custom_call.1} parent=31 // pred_region
          %v404 = vld [vmem:[%s245] sm:$0x3]
          %v407 = vrot.slane %v384, 7
          %vm408 = vcmask 1040384
          %v409 = vsel %vm408, %v383, %v407
          %v411 = vadd.f32 %v404, %v409
          %v412 = vlaneseq
          %vm413 = vcmp.ge.s32.totalorder %v412, 0
          %vm414 = vcmp.lt.s32.totalorder %v412, 256
          %vm415 = vmand %vm413, %vm414
          %416 = vst.msk [vmem:[%s245] sm:$0x3] %vm415, %v411
        $region44: #{tpu_custom_call.1} parent=31 // pred_fallthru
          _
        %s417 = sand.u32 %s130, 1
        %s418 = scalar_lea.sflag [#allocation4], %s417
        %s419 = sand.u32 %s130, 1
        %s420 = smul.addr %s419, 2
        %s421 = scalar_lea.vmem [#allocation5], %s420
        // Predicated region
        $region45: #{tpu_custom_call.1} parent=31 // pred_check
          %p422 = pneg %p140
        $region46: #{tpu_custom_call.1} parent=31 // pred_check_branch
          %424 = sbr.rel (%p422) target = $region48
        $region47: #{tpu_custom_call.1} parent=31 // pred_region
          %426 = vsyncadd %s418, 0
          %s427 = smul.addr %s26, 2
          %s428 = smul.addr %s25, 2
          %s429 = sadd.s32 %s427, %s428
          %s430 = scalar_lea.hbm %s3, %s429
          %s432 = sshll.u32 %s421, 4
          %s433 = int_to_ptr.vmem [resolvable:$true] %s432
          %s434 = sshll.u32 %s430, 4
          %s435 = int_to_ptr.hbm [resolvable:$true] %s434
          %437 = dma.vmem_to_hbm [thread:$0]  %s433, 32, %s435, %s418
        $region48: #{tpu_custom_call.1} parent=31 // pred_fallthru
          _
      $region32: #{tpu_custom_call.1} parent=5 // pred_fallthru
        _
      %p438 = scmp.le.s32.totalorder 2, %s15
      // Predicated region
      $region49: #{tpu_custom_call.1} parent=5 // pred_check
        %p439 = pneg %p438
      $region50: #{tpu_custom_call.1} parent=5 // pred_check_branch
        %441 = sbr.rel (%p439) target = $region52
      $region51: #{tpu_custom_call.1} parent=5 // pred_region
        %s442 = ssub.s32 %s15, 2
        // Predicated region
        $region53: #{tpu_custom_call.1} parent=51 // pred_check
          %p443 = pneg %p146
        $region54: #{tpu_custom_call.1} parent=51 // pred_check_branch
          %445 = sbr.rel (%p443) target = $region56
        $region55: #{tpu_custom_call.1} parent=51 // pred_region
          %s446 = sand.u32 %s131, 1
          %s447 = scalar_lea.sflag [#allocation4], %s446
          %s448 = sand.u32 %s131, 1
          %s449 = smul.addr %s448, 2
          %s450 = scalar_lea.vmem [#allocation5], %s449
          %452 = dma.done %s447, 32
        $region56: #{tpu_custom_call.1} parent=51 // pred_fallthru
          _
      $region52: #{tpu_custom_call.1} parent=5 // pred_fallthru
        _
    $region6: #{tpu_custom_call.1} parent=1 // loop_footer
      %s19 = sadd.s32 1, %s15
    $region7: #{tpu_custom_call.1} parent=1 // loop_footer_branch
      %14 = sbr.rel target = $region3
    $region8: #{tpu_custom_call.1} parent=1 // loop_exit
      _
    %453 = vsyncpa [#allocation3], 1
    %s454 = scalar_lea.sflag [#allocation3], 1
    %455 = vsyncpa %s454, 1
    %456 = vsyncpa [#allocation4], 1
    %s457 = scalar_lea.sflag [#allocation4], 1
    %458 = vsyncpa %s457, 1

</llo_original>
